<compile_context>
chip_gen: v6e
topology: v6e:2x2x1
jax: 0.10.0
libtpu: 0.0.40
codegen_flags: <defaults>
</compile_context>

<pallas_src>
import functools

import jax
import jax.numpy as jnp
from jax import lax
from jax.experimental import pallas as pl
from jax.experimental.pallas import tpu as pltpu

_LANE = 128
_SUBLANE = 8
_NSEM = 8                                 # row-gather DMAs kept in flight
_VMEM_TILE_BUDGET = 30 * 1024 * 1024      # per-tile working-set budget (v7x-safe)
_VMEM_LIMIT = 48 * 1024 * 1024            # scoped VMEM limit (<= v7x 64 MiB phys)


def _round_up(x, m):
    return (x + m - 1) // m * m


# ---------------------------------------------------------------------------
# Fused kernel: manual DMA embedding gather + Linear + seq-max + cosine
# triplet loss, gridded over batch tiles (anchor/positive/negative fused).
# ---------------------------------------------------------------------------
def _fused_kernel(ids_ref, emb_hbm, w_ref, b_ref, out_ref, x_buf, sem, *,
                  margin, seq_len, batch_tile, operand_dtype):
    rows = 3 * batch_tile * seq_len           # static
    base = pl.program_id(0) * rows            # tile-major flat id offset

    def _issue(r, slot):
        tok = ids_ref[base + r]
        pltpu.make_async_copy(emb_hbm.at[pl.ds(tok, 1)],
                              x_buf.at[pl.ds(r, 1)],
                              sem.at[slot]).start()

    # Prime the DMA ring (rows >= _NSEM always: rows is a multiple of 24).
    @pl.loop(0, _NSEM)
    def _(r):
        _issue(r, r)

    # Steady state: keep _NSEM row gathers in flight.
    @pl.loop(_NSEM, rows)
    def _(r):
        slot = r & (_NSEM - 1)
        tok = ids_ref[base + r]               # scalar read before the wait
        pltpu.make_async_copy(emb_hbm.at[pl.ds(0, 1)],
                              x_buf.at[pl.ds(r - _NSEM, 1)],
                              sem.at[slot]).wait()
        pltpu.make_async_copy(emb_hbm.at[pl.ds(tok, 1)],
                              x_buf.at[pl.ds(r, 1)],
                              sem.at[slot]).start()

    # Drain: the last _NSEM DMAs used slots 0.._NSEM-1 in order (rows % 8 == 0).
    @pl.loop(0, _NSEM)
    def _(s):
        pltpu.make_async_copy(emb_hbm.at[pl.ds(0, 1)],
                              x_buf.at[pl.ds(rows - _NSEM + s, 1)],
                              sem.at[s]).wait()

    hp = x_buf.shape[-1]
    # One fused Linear matmul for all 3 branches (bf16 operands, f32 accum).
    y = jnp.dot(x_buf[...].astype(operand_dtype), w_ref[...],
                preferred_element_type=jnp.float32)
    y = y + b_ref[...]                        # bias added once, fused
    # Dropout(0.5): identity at inference.
    # Max over the sequence dim (seq_len is a multiple of 8 -> tile-aligned).
    y = y.reshape(3, batch_tile, seq_len, hp)
    enc = jnp.max(y, axis=2)                  # [3, TB, Hp]
    a_vec, p_vec, n_vec = enc[0], enc[1], enc[2]

    eps = 1e-12                               # torch F.normalize eps

    def cos_dist(u, v):
        uu = jnp.sum(u * u, axis=-1, keepdims=True)
        vv = jnp.sum(v * v, axis=-1, keepdims=True)
        # 1/max(||u||,eps) * 1/max(||v||,eps) via rsqrt on the EUP.
        inv = lax.rsqrt(jnp.maximum(uu, eps * eps)) * \
              lax.rsqrt(jnp.maximum(vv, eps * eps))
        return 1.0 - jnp.sum(u * v, axis=-1, keepdims=True) * inv   # [TB, 1]

    d_ap = cos_dist(a_vec, p_vec)
    d_an = cos_dist(a_vec, n_vec)
    hinge = jnp.maximum(d_ap - d_an + margin, 0.0)        # [TB, 1]
    part = jnp.sum(hinge)
    # Lane-dense partial-sum block; final mean is done once in the wrapper.
    out_ref[...] = jnp.broadcast_to(part, (1, 1, _LANE)).astype(jnp.float32)


# ---------------------------------------------------------------------------
# Parameter preparation (hoisted: call once, reuse across loss invocations).
# ---------------------------------------------------------------------------
def prepare_siamese_params(emb, weight, bias, operand_dtype=jnp.bfloat16):
    V, H = emb.shape
    Hp = _round_up(max(H, _LANE), _LANE)
    # Padded hidden columns stay exactly zero through linear / max / cosine.
    emb_p = jnp.zeros((V, Hp), jnp.float32).at[:, :H].set(emb.astype(jnp.float32))
    w_t_p = jnp.zeros((Hp, Hp), jnp.float32).at[:H, :H].set(
        weight.T.astype(jnp.float32)).astype(operand_dtype)    # x @ W.T + b
    b_p = jnp.zeros((1, Hp), jnp.float32).at[0, :H].set(bias.astype(jnp.float32))
    return dict(emb=emb_p, w_t=w_t_p, b=b_p, vocab=V, hidden=H,
                hidden_padded=Hp, operand_dtype=operand_dtype)


def _pick_batch_tile(B, S_pad, Hp, operand_bytes):
    def vmem_est(bt):
        rows = 3 * bt * S_pad
        x_bytes = rows * Hp * 4                      # f32 gather scratch
        y_bytes = rows * Hp * 4                      # f32 matmul result
        xc_bytes = rows * Hp * operand_bytes         # cast MXU operand
        w_bytes = 2 * Hp * Hp * operand_bytes        # double-buffered weight
        return x_bytes + y_bytes + xc_bytes + w_bytes + (2 << 20)

    divisors = [d for d in range(1, B + 1) if B % d == 0]
    fitting = [d for d in divisors if vmem_est(d) <= _VMEM_TILE_BUDGET] or [1]
    multi = [d for d in fitting if B // d >= 2]      # >= 2 tiles for v7x megacore
    return max(multi) if multi else max(fitting)


# ---------------------------------------------------------------------------
# Wrapper: ids layout + pallas_call.
# ---------------------------------------------------------------------------
def siamese_triplet_loss(anchor_ids, positive_ids, negative_ids, params,
                         margin, *, batch_tile=None):
    B, S = anchor_ids.shape
    V = params["vocab"]
    Hp = params["hidden_padded"]
    operand_dtype = params["operand_dtype"]
    operand_bytes = jnp.dtype(operand_dtype).itemsize

    S_pad = _round_up(max(S, _SUBLANE), _SUBLANE)
    if batch_tile is None:
        batch_tile = _pick_batch_tile(B, S_pad, Hp, operand_bytes)
    if B % batch_tile != 0:
        batch_tile = B
    num_bt = B // batch_tile
    rows = 3 * batch_tile * S_pad

    # Fuse the 3 branches and lay token ids out tile-major so each grid step
    # reads a contiguous SMEM range.  Clamp ids so the gather never goes OOB.
    ids = jnp.stack([anchor_ids, positive_ids, negative_ids]).astype(jnp.int32)
    ids = jnp.clip(ids, 0, V - 1)
    if S_pad != S:
        # Repeating the last token is max-pool neutral; keeps reshape aligned.
        pad = jnp.broadcast_to(ids[..., -1:], (3, B, S_pad - S))
        ids = jnp.concatenate([ids, pad], axis=-1)
    ids_flat = (ids.reshape(3, num_bt, batch_tile, S_pad)
                   .transpose(1, 0, 2, 3).reshape(-1))          # [num_bt*rows]

    kernel = functools.partial(_fused_kernel,
                               margin=float(margin),
                               seq_len=S_pad,
                               batch_tile=batch_tile,
                               operand_dtype=operand_dtype)

    partials = pl.pallas_call(
        kernel,
        out_shape=jax.ShapeDtypeStruct((num_bt, 1, _LANE), jnp.float32),
        grid_spec=pltpu.PrefetchScalarGridSpec(
            num_scalar_prefetch=1,
            grid=(num_bt,),
            in_specs=[
                pl.BlockSpec(memory_space=pl.ANY),                   # emb (HBM)
                pl.BlockSpec((Hp, Hp), lambda i, ids_sref: (0, 0)),  # weight
                pl.BlockSpec((1, Hp), lambda i, ids_sref: (0, 0)),   # bias
            ],
            out_specs=pl.BlockSpec((1, 1, _LANE),
                                   lambda i, ids_sref: (i, 0, 0)),
            scratch_shapes=[
                pltpu.VMEM((rows, Hp), jnp.float32),   # gathered activation slab
                pltpu.SemaphoreType.DMA((_NSEM,)),
            ],
        ),
        compiler_params=pltpu.CompilerParams(
            dimension_semantics=("parallel",),   # megacore-shardable on v7x
            vmem_limit_bytes=_VMEM_LIMIT,
        ),
    )(ids_flat, params["emb"], params["w_t"], params["b"])

    return jnp.sum(partials[:, 0, 0]) / B


# ---------------------------------------------------------------------------
# Pure-JAX reference (mirrors the PyTorch forward).
# ---------------------------------------------------------------------------
def _reference_loss(a_ids, p_ids, n_ids, emb, weight, bias, margin):
    def encode(ids):
        x = emb[ids]                              # [B, S, H]
        x = x @ weight.T + bias
        return jnp.max(x, axis=1)

    def cos_dist(u, v):
        eps = 1e-12
        nu = u / jnp.maximum(jnp.linalg.norm(u, axis=-1, keepdims=True), eps)
        nv = v / jnp.maximum(jnp.linalg.norm(v, axis=-1, keepdims=True), eps)
        return 1.0 - jnp.sum(nu * nv, axis=-1)

    a, p, n = encode(a_ids), encode(p_ids), encode(n_ids)
    return jnp.mean(jnp.maximum(cos_dist(a, p) - cos_dist(a, n) + margin, 0.0))


if __name__ == "__main__":
    B, S, H, V = 4, 8, 32, 64
    margin = 0.2

    key = jax.random.PRNGKey(0)
    k_emb, k_w, k_b, k_a, k_p, k_n = jax.random.split(key, 6)

    # Deterministic parameter init (shapes from the module __init__).
    emb = jax.random.normal(k_emb, (V, H), dtype=jnp.float32)
    emb = emb.at[0].set(0.0)                      # padding_idx=0
    bound = 1.0 / jnp.sqrt(H)
    weight = jax.random.uniform(k_w, (H, H), jnp.float32, -bound, bound)
    bias = jax.random.uniform(k_b, (H,), jnp.float32, -bound, bound)

    anchor = jax.random.randint(k_a, (B, S), 0, V, dtype=jnp.int32)
    positive = jax.random.randint(k_p, (B, S), 0, V, dtype=jnp.int32)
    negative = jax.random.randint(k_n, (B, S), 0, V, dtype=jnp.int32)

    ref = _reference_loss(anchor, positive, negative, emb, weight, bias, margin)

    # f32 MXU-operand path: tight tolerance vs. the pure-JAX reference.
    params_f32 = prepare_siamese_params(emb, weight, bias,
                                        operand_dtype=jnp.float32)
    loss_f32 = siamese_triplet_loss(anchor, positive, negative, params_f32,
                                    margin)
    jax.block_until_ready(loss_f32)
    assert jnp.allclose(loss_f32, ref, atol=1e-4, rtol=1e-4), (loss_f32, ref)

    # bf16 MXU-operand default (params prepared/cast once, hoisted).
    params_bf16 = prepare_siamese_params(emb, weight, bias)
    loss_bf16 = siamese_triplet_loss(anchor, positive, negative, params_bf16,
                                     margin)
    jax.block_until_ready(loss_bf16)
    assert jnp.abs(loss_bf16 - ref) < 5e-2, (loss_bf16, ref)

    print("KERNEL_OK")
</pallas_src>

<mosaic_0001>
module attributes {stable_mosaic.version = 11 : i64} {
  func.func @_fused_kernel(%arg0: i32, %arg1: memref<96xi32, #tpu.memory_space<smem>>, %arg2: memref<64x128xf32, #tpu.memory_space<any>>, %arg3: memref<128x128xf32, #tpu.memory_space<vmem>>, %arg4: memref<1x128xf32, #tpu.memory_space<vmem>>, %arg5: memref<1x1x128xf32, #tpu.memory_space<vmem>>, %arg6: memref<48x128xf32, #tpu.memory_space<vmem>>, %arg7: memref<8x!tpu.dma_semaphore, #tpu.memory_space<semaphore_mem>>) attributes {dimension_semantics = [#tpu.dimension_semantics<parallel>], iteration_bounds = array<i64: 2>, scalar_prefetch = 1 : i64, scratch_operands = 2 : i64, tpu.core_type = #tpu.core_type<tc>, window_params = [{}, {pipeline_mode = #tpu.pipeline_mode<synchronous>, transform_indices = @transform_1, window_bounds = array<i64: 128, 128>}, {pipeline_mode = #tpu.pipeline_mode<synchronous>, transform_indices = @transform_2, window_bounds = array<i64: 1, 128>}, {transform_indices = @transform_3, window_bounds = array<i64: 1, 1, 128>}]} {
    %c48_i32 = arith.constant 48 : i32
    %0 = arith.muli %arg0, %c48_i32 : i32
    %c0_i32 = arith.constant 0 : i32
    %c8_i32 = arith.constant 8 : i32
    %1 = arith.addi %c0_i32, %c8_i32 : i32
    %c1_i32 = arith.constant 1 : i32
    scf.for %arg8 = %c0_i32 to %1 step %c1_i32  : i32 {
      %c1_i32_32 = arith.constant 1 : i32
      %67 = arith.muli %arg8, %c1_i32_32 : i32
      %c0_i32_33 = arith.constant 0 : i32
      %68 = arith.addi %c0_i32_33, %67 : i32
      %69 = arith.addi %0, %68 : i32
      %70 = arith.index_cast %69 : i32 to index
      %71 = memref.load %arg1[%70] : memref<96xi32, #tpu.memory_space<smem>>
      %c0_i32_34 = arith.constant 0 : i32
      %72 = tpu.memref_slice %arg2[%71, %c0_i32_34] : memref<64x128xf32, #tpu.memory_space<any>> -> memref<1x128xf32, #tpu.memory_space<any>>
      %c0_i32_35 = arith.constant 0 : i32
      %73 = tpu.memref_slice %arg6[%68, %c0_i32_35] : memref<48x128xf32, #tpu.memory_space<vmem>> -> memref<1x128xf32, #tpu.memory_space<vmem>>
      %74 = tpu.memref_slice %arg7[%68] : memref<8x!tpu.dma_semaphore, #tpu.memory_space<semaphore_mem>> -> memref<1x!tpu.dma_semaphore, #tpu.memory_space<semaphore_mem>>
      %75 = tpu.memref_squeeze %74 : memref<1x!tpu.dma_semaphore, #tpu.memory_space<semaphore_mem>> -> memref<!tpu.dma_semaphore, #tpu.memory_space<semaphore_mem>>
      tpu.enqueue_dma source(%72 : memref<1x128xf32, #tpu.memory_space<any>>) target(%73 : memref<1x128xf32, #tpu.memory_space<vmem>>) target_semaphore(%75 : memref<!tpu.dma_semaphore, #tpu.memory_space<semaphore_mem>>)
    }
    %c8_i32_0 = arith.constant 8 : i32
    %c0_i32_1 = arith.constant 0 : i32
    %c40_i32 = arith.constant 40 : i32
    %2 = arith.addi %c0_i32_1, %c40_i32 : i32
    %c1_i32_2 = arith.constant 1 : i32
    scf.for %arg8 = %c0_i32_1 to %2 step %c1_i32_2  : i32 {
      %c1_i32_32 = arith.constant 1 : i32
      %67 = arith.muli %arg8, %c1_i32_32 : i32
      %c8_i32_33 = arith.constant 8 : i32
      %68 = arith.addi %c8_i32_33, %67 : i32
      %c7_i32 = arith.constant 7 : i32
      %69 = arith.andi %68, %c7_i32 : i32
      %70 = arith.addi %0, %68 : i32
      %71 = arith.index_cast %70 : i32 to index
      %72 = memref.load %arg1[%71] : memref<96xi32, #tpu.memory_space<smem>>
      %c8_i32_34 = arith.constant 8 : i32
      %73 = arith.subi %68, %c8_i32_34 : i32
      %c0_i32_35 = arith.constant 0 : i32
      %c0_i32_36 = arith.constant 0 : i32
      %74 = tpu.memref_slice %arg2[%c0_i32_35, %c0_i32_36] : memref<64x128xf32, #tpu.memory_space<any>> -> memref<1x128xf32, #tpu.memory_space<any>>
      %c0_i32_37 = arith.constant 0 : i32
      %75 = tpu.memref_slice %arg6[%73, %c0_i32_37] : memref<48x128xf32, #tpu.memory_space<vmem>> -> memref<1x128xf32, #tpu.memory_space<vmem>>
      %76 = tpu.memref_slice %arg7[%69] : memref<8x!tpu.dma_semaphore, #tpu.memory_space<semaphore_mem>> -> memref<1x!tpu.dma_semaphore, #tpu.memory_space<semaphore_mem>>
      %77 = tpu.memref_squeeze %76 : memref<1x!tpu.dma_semaphore, #tpu.memory_space<semaphore_mem>> -> memref<!tpu.dma_semaphore, #tpu.memory_space<semaphore_mem>>
      tpu.wait_dma2 semaphore(%77 : memref<!tpu.dma_semaphore, #tpu.memory_space<semaphore_mem>>) src(%74 : memref<1x128xf32, #tpu.memory_space<any>>) dst(%75 : memref<1x128xf32, #tpu.memory_space<vmem>>)
      %c0_i32_38 = arith.constant 0 : i32
      %78 = tpu.memref_slice %arg2[%72, %c0_i32_38] : memref<64x128xf32, #tpu.memory_space<any>> -> memref<1x128xf32, #tpu.memory_space<any>>
      %c0_i32_39 = arith.constant 0 : i32
      %79 = tpu.memref_slice %arg6[%68, %c0_i32_39] : memref<48x128xf32, #tpu.memory_space<vmem>> -> memref<1x128xf32, #tpu.memory_space<vmem>>
      %80 = tpu.memref_slice %arg7[%69] : memref<8x!tpu.dma_semaphore, #tpu.memory_space<semaphore_mem>> -> memref<1x!tpu.dma_semaphore, #tpu.memory_space<semaphore_mem>>
      %81 = tpu.memref_squeeze %80 : memref<1x!tpu.dma_semaphore, #tpu.memory_space<semaphore_mem>> -> memref<!tpu.dma_semaphore, #tpu.memory_space<semaphore_mem>>
      tpu.enqueue_dma source(%78 : memref<1x128xf32, #tpu.memory_space<any>>) target(%79 : memref<1x128xf32, #tpu.memory_space<vmem>>) target_semaphore(%81 : memref<!tpu.dma_semaphore, #tpu.memory_space<semaphore_mem>>)
    }
    %c40_i32_3 = arith.constant 40 : i32
    %c0_i32_4 = arith.constant 0 : i32
    %c8_i32_5 = arith.constant 8 : i32
    %3 = arith.addi %c0_i32_4, %c8_i32_5 : i32
    %c1_i32_6 = arith.constant 1 : i32
    scf.for %arg8 = %c0_i32_4 to %3 step %c1_i32_6  : i32 {
      %c1_i32_32 = arith.constant 1 : i32
      %67 = arith.muli %arg8, %c1_i32_32 : i32
      %c0_i32_33 = arith.constant 0 : i32
      %68 = arith.addi %c0_i32_33, %67 : i32
      %c40_i32_34 = arith.constant 40 : i32
      %69 = arith.addi %c40_i32_34, %68 : i32
      %c0_i32_35 = arith.constant 0 : i32
      %c0_i32_36 = arith.constant 0 : i32
      %70 = tpu.memref_slice %arg2[%c0_i32_35, %c0_i32_36] : memref<64x128xf32, #tpu.memory_space<any>> -> memref<1x128xf32, #tpu.memory_space<any>>
      %c0_i32_37 = arith.constant 0 : i32
      %71 = tpu.memref_slice %arg6[%69, %c0_i32_37] : memref<48x128xf32, #tpu.memory_space<vmem>> -> memref<1x128xf32, #tpu.memory_space<vmem>>
      %72 = tpu.memref_slice %arg7[%68] : memref<8x!tpu.dma_semaphore, #tpu.memory_space<semaphore_mem>> -> memref<1x!tpu.dma_semaphore, #tpu.memory_space<semaphore_mem>>
      %73 = tpu.memref_squeeze %72 : memref<1x!tpu.dma_semaphore, #tpu.memory_space<semaphore_mem>> -> memref<!tpu.dma_semaphore, #tpu.memory_space<semaphore_mem>>
      tpu.wait_dma2 semaphore(%73 : memref<!tpu.dma_semaphore, #tpu.memory_space<semaphore_mem>>) src(%70 : memref<1x128xf32, #tpu.memory_space<any>>) dst(%71 : memref<1x128xf32, #tpu.memory_space<vmem>>)
    }
    %c8_i32_7 = arith.constant 8 : i32
    %c0 = arith.constant 0 : index
    %c0_8 = arith.constant 0 : index
    %4 = vector.load %arg6[%c0, %c0_8] : memref<48x128xf32, #tpu.memory_space<vmem>>, vector<48x128xf32>
    %c0_9 = arith.constant 0 : index
    %c0_10 = arith.constant 0 : index
    %5 = vector.load %arg3[%c0_9, %c0_10] : memref<128x128xf32, #tpu.memory_space<vmem>>, vector<128x128xf32>
    %cst = arith.constant dense<0.000000e+00> : vector<48x128xf32>
    %6 = tpu.matmul %4, %5, %cst {dimension_numbers = #tpu.dot_dimension_numbers<[1], [0], [0], [1], [0, 0, 1, 1], [], []>} : vector<48x128xf32>, vector<128x128xf32>, vector<48x128xf32> -> vector<48x128xf32>
    %c0_11 = arith.constant 0 : index
    %c0_12 = arith.constant 0 : index
    %7 = vector.load %arg4[%c0_11, %c0_12] : memref<1x128xf32, #tpu.memory_space<vmem>>, vector<1x128xf32>
    %8 = vector.broadcast %7 : vector<1x128xf32> to vector<48x128xf32>
    %9 = arith.addf %6, %8 : vector<48x128xf32>
    %10 = vector.shape_cast %9 : vector<48x128xf32> to vector<3x2x8x128xf32>
    %cst_13 = arith.constant dense<0xFF800000> : vector<3x2x128xf32>
    %11 = vector.multi_reduction <maximumf>, %10, %cst_13 [2] : vector<3x2x8x128xf32> to vector<3x2x128xf32>
    %12 = vector.extract_strided_slice %11 {offsets = [0, 0, 0], sizes = [1, 2, 128], strides = [1, 1, 1]} : vector<3x2x128xf32> to vector<1x2x128xf32>
    %13 = vector.shape_cast %12 : vector<1x2x128xf32> to vector<2x128xf32>
    %14 = vector.extract_strided_slice %11 {offsets = [1, 0, 0], sizes = [1, 2, 128], strides = [1, 1, 1]} : vector<3x2x128xf32> to vector<1x2x128xf32>
    %15 = vector.shape_cast %14 : vector<1x2x128xf32> to vector<2x128xf32>
    %16 = vector.extract_strided_slice %11 {offsets = [2, 0, 0], sizes = [1, 2, 128], strides = [1, 1, 1]} : vector<3x2x128xf32> to vector<1x2x128xf32>
    %17 = vector.shape_cast %16 : vector<1x2x128xf32> to vector<2x128xf32>
    %18 = arith.mulf %13, %13 : vector<2x128xf32>
    %cst_14 = arith.constant dense<0.000000e+00> : vector<2xf32>
    %19 = vector.multi_reduction <add>, %18, %cst_14 [1] : vector<2x128xf32> to vector<2xf32>
    %20 = vector.shape_cast %19 : vector<2xf32> to vector<2x1xf32>
    %21 = arith.mulf %15, %15 : vector<2x128xf32>
    %cst_15 = arith.constant dense<0.000000e+00> : vector<2xf32>
    %22 = vector.multi_reduction <add>, %21, %cst_15 [1] : vector<2x128xf32> to vector<2xf32>
    %23 = vector.shape_cast %22 : vector<2xf32> to vector<2x1xf32>
    %cst_16 = arith.constant 1.000000e-24 : f32
    %24 = vector.broadcast %cst_16 : f32 to vector<2x1xf32>
    %25 = arith.maximumf %20, %24 : vector<2x1xf32>
    %26 = math.rsqrt %25 : vector<2x1xf32>
    %cst_17 = arith.constant 1.000000e-24 : f32
    %27 = vector.broadcast %cst_17 : f32 to vector<2x1xf32>
    %28 = arith.maximumf %23, %27 : vector<2x1xf32>
    %29 = math.rsqrt %28 : vector<2x1xf32>
    %30 = arith.mulf %26, %29 : vector<2x1xf32>
    %31 = arith.mulf %13, %15 : vector<2x128xf32>
    %cst_18 = arith.constant dense<0.000000e+00> : vector<2xf32>
    %32 = vector.multi_reduction <add>, %31, %cst_18 [1] : vector<2x128xf32> to vector<2xf32>
    %33 = vector.shape_cast %32 : vector<2xf32> to vector<2x1xf32>
    %34 = arith.mulf %33, %30 : vector<2x1xf32>
    %cst_19 = arith.constant 1.000000e+00 : f32
    %35 = vector.broadcast %cst_19 : f32 to vector<2x1xf32>
    %36 = arith.subf %35, %34 : vector<2x1xf32>
    %37 = arith.mulf %13, %13 : vector<2x128xf32>
    %cst_20 = arith.constant dense<0.000000e+00> : vector<2xf32>
    %38 = vector.multi_reduction <add>, %37, %cst_20 [1] : vector<2x128xf32> to vector<2xf32>
    %39 = vector.shape_cast %38 : vector<2xf32> to vector<2x1xf32>
    %40 = arith.mulf %17, %17 : vector<2x128xf32>
    %cst_21 = arith.constant dense<0.000000e+00> : vector<2xf32>
    %41 = vector.multi_reduction <add>, %40, %cst_21 [1] : vector<2x128xf32> to vector<2xf32>
    %42 = vector.shape_cast %41 : vector<2xf32> to vector<2x1xf32>
    %cst_22 = arith.constant 1.000000e-24 : f32
    %43 = vector.broadcast %cst_22 : f32 to vector<2x1xf32>
    %44 = arith.maximumf %39, %43 : vector<2x1xf32>
    %45 = math.rsqrt %44 : vector<2x1xf32>
    %cst_23 = arith.constant 1.000000e-24 : f32
    %46 = vector.broadcast %cst_23 : f32 to vector<2x1xf32>
    %47 = arith.maximumf %42, %46 : vector<2x1xf32>
    %48 = math.rsqrt %47 : vector<2x1xf32>
    %49 = arith.mulf %45, %48 : vector<2x1xf32>
    %50 = arith.mulf %13, %17 : vector<2x128xf32>
    %cst_24 = arith.constant dense<0.000000e+00> : vector<2xf32>
    %51 = vector.multi_reduction <add>, %50, %cst_24 [1] : vector<2x128xf32> to vector<2xf32>
    %52 = vector.shape_cast %51 : vector<2xf32> to vector<2x1xf32>
    %53 = arith.mulf %52, %49 : vector<2x1xf32>
    %cst_25 = arith.constant 1.000000e+00 : f32
    %54 = vector.broadcast %cst_25 : f32 to vector<2x1xf32>
    %55 = arith.subf %54, %53 : vector<2x1xf32>
    %56 = arith.subf %36, %55 : vector<2x1xf32>
    %cst_26 = arith.constant 2.000000e-01 : f32
    %57 = vector.broadcast %cst_26 : f32 to vector<2x1xf32>
    %58 = arith.addf %56, %57 : vector<2x1xf32>
    %cst_27 = arith.constant 0.000000e+00 : f32
    %59 = vector.broadcast %cst_27 : f32 to vector<2x1xf32>
    %60 = arith.maximumf %58, %59 : vector<2x1xf32>
    %61 = vector.shape_cast %60 : vector<2x1xf32> to vector<1x2x1xf32>
    %cst_28 = arith.constant dense<0.000000e+00> : vector<1xf32>
    %62 = vector.multi_reduction <add>, %61, %cst_28 [1, 2] : vector<1x2x1xf32> to vector<1xf32>
    %63 = vector.shape_cast %62 : vector<1xf32> to vector<1x1x1xf32>
    %64 = vector.extract %63[0, 0, 0] : f32 from vector<1x1x1xf32>
    %65 = vector.broadcast %64 : f32 to vector<1x1x128xf32>
    %c0_29 = arith.constant 0 : index
    %c0_30 = arith.constant 0 : index
    %c0_31 = arith.constant 0 : index
    %66 = vector.load %arg5[%c0_29, %c0_30, %c0_31] : memref<1x1x128xf32, #tpu.memory_space<vmem>>, vector<1x1x128xf32>
    tpu.vector_store %arg5[%c0_29, %c0_30, %c0_31], %65 {strides = array<i32>} : memref<1x1x128xf32, #tpu.memory_space<vmem>>, vector<1x1x128xf32>,
    return
  }
  func.func @transform_1(%arg0: i32, %arg1: memref<96xi32, #tpu.memory_space<smem>>) -> (i32, i32) {
    %c0_i32 = arith.constant 0 : i32
    %c0_i32_0 = arith.constant 0 : i32
    %c0_i32_1 = arith.constant 0 : i32
    return %c0_i32, %c0_i32_0 : i32, i32
  }
  func.func @transform_2(%arg0: i32, %arg1: memref<96xi32, #tpu.memory_space<smem>>) -> (i32, i32) {
    %c0_i32 = arith.constant 0 : i32
    %c0_i32_0 = arith.constant 0 : i32
    %c0_i32_1 = arith.constant 0 : i32
    return %c0_i32, %c0_i32_0 : i32, i32
  }
  func.func @transform_3(%arg0: i32, %arg1: memref<96xi32, #tpu.memory_space<smem>>) -> (i32, i32, i32) {
    %c0_i32 = arith.constant 0 : i32
    %c0_i32_0 = arith.constant 0 : i32
    %c0_i32_1 = arith.constant 0 : i32
    return %arg0, %c0_i32, %c0_i32_0 : i32, i32, i32
  }
}

</mosaic_0001>

<llo_original>
// kernel: tpu_custom_call.1
$region0: #{tpu_custom_call.1}
  #allocation0 [shape = 'u32[]', space=smem, size = 0x4, offset = 0x4, fixed_abs, tag = 'smem constant byte address 0x4 - core index']
  #allocation1 [shape = 'u32[144,128]{1,0:T(1,128)}', space=vmem, size = 0x12000, scoped, tag = 'internal scratch']
  #allocation2 [shape = 'f32[48,128]{1,0:T(8,128)}', space=vmem, size = 0x6000, scoped, tag = 'scratch operand']
  #allocation3 [shape = 's32[8]{0}', space=sflag, size = 0x20, scoped, tag = 'scratch operand']
  #allocation4 [shape = 's32[1]{0}', space=sflag, size = 0x4, scoped, tag = 'scoped memory for tpu_custom_call.1']
  #allocation5 [shape = 'u8[512]{0}', space=smem, size = 0x200, scoped, tag = 'prefetched SMEM operand 0']
  #allocation10 [shape = 's32[]', space=sflag, size = 0x4, offset = 0, fixed_abs, tag = 'sflag constant byte address 0x0 - dummy sync flag']
  #allocation11 [shape = 's32[]', space=sflag, size = 0x4, offset = 0, fixed_abs, tag = 'sflag constant byte address 0x0 - dummy sync flag']
  #allocation12 [shape = 'u32[]', space=smem, size = 0x4, offset = 0x44, fixed_abs, tag = 'smem constant byte address 0x44 - assertion arg 0']
  #allocation13 [shape = 'u32[]', space=smem, size = 0x4, offset = 0x48, fixed_abs, tag = 'smem constant byte address 0x48 - assertion arg 1']
  #allocation14 [shape = 's32[]', space=sflag, size = 0x4, offset = 0, fixed_abs, tag = 'sflag constant byte address 0x0 - dummy sync flag']
  #allocation15 [shape = 's32[]', space=sflag, size = 0x4, offset = 0, fixed_abs, tag = 'sflag constant byte address 0x0 - dummy sync flag']
  %s0 = inlined_call_operand.hbm [shape: s32[96], index: 0, kind: input, shape index: {}]
  %s1 = inlined_call_operand.hbm [shape: f32[64,128], index: 1, kind: input, shape index: {}]
  %s2 = inlined_call_operand.hbm [shape: f32[128,128], index: 2, kind: input, shape index: {}]
  %s3 = inlined_call_operand.vmem [shape: f32[1,128], index: 3, kind: input, shape index: {}]
  %s4 = inlined_call_operand.hbm [shape: f32[2,1,128], index: 4, kind: output, shape index: {}]
  %s5 = sld [smem:[#allocation0]]
  $region74: #{tpu_custom_call.1} parent=0
    _
  %s7 = ssub.s32 1, %s5
  %s8 = scalar_select 0, %s7, %s5
  %10 = dma.hbm_to_smem %s0, 16, [#allocation5], [#allocation4]
  %11 = dma.done [#allocation4], 16
  %12 = sfence
  $region1: #{tpu_custom_call.1} parent=0
    #allocation6 [shape = 'u8[65536]{0}', space=vmem, size = 0x10000, scoped, tag = 'input window, operand 2, single buffered']
    #allocation7 [shape = 's32[2]{0}', space=sflag, size = 0x8, scoped, tag = 'scoped memory for tpu_custom_call.1']
    #allocation8 [shape = 's32[2]{0}', space=sflag, size = 0x8, scoped, tag = 'scoped memory for tpu_custom_call.1']
    #allocation9 [shape = 'u8[1024]{0}', space=vmem, size = 0x400, scoped, tag = 'output window, operand 0']
    %13 = vsyncpa [#allocation7], 0
    %14 = vsyncpa [#allocation8], 0
    %s15 = scalar_lea.sflag [#allocation8], 1
    %16 = vsyncpa %s15, 0
    loop: start=0, step=1, limit=4
    $region2: #{tpu_custom_call.1} parent=1 // loop_pre_header
      _
    $region3: #{tpu_custom_call.1} parent=1 // loop_header
      %s18 = sphi 0, %s22
      %p19 = scmp.ge.s32.totalorder %s18, 4
      %s26 = sphi 0, %s26
      %s28 = sphi 0, %s26
      %s29 = sphi 0, %s28
      %s43 = sphi 0, %s29
      %s47 = sphi 0, %s47
      %s49 = sphi 0, %s47
      %s50 = sphi 0, %s49
      %s64 = sphi 0, %s50
      %s70 = sphi 0, %s72
      %s73 = sphi 0, %s70
      %s74 = sphi 0, %s73
      %s90 = sphi 0, %s74
    $region4: #{tpu_custom_call.1} parent=1 // loop_header_branch
      %21 = sbr.rel (%p19) target = $region8
    $region5: #{tpu_custom_call.1} parent=1 // loop_body
      %s23 = ssub.s32 %s18, 1
      %s24 = ssub.s32 %s18, 2
      %s25 = sadd.s32 %s18, 1
      %s27 = sadd.s32 %s26, 1
      %p30 = scmp.eq.s32.totalorder %s18, 1
      %p31 = scmp.ne.s32.totalorder %s26, %s28
      %p32 = scmp.eq.s32.totalorder %s18, 0
      %p33 = por %p31, %p32
      %p34 = scmp.ne.s32.totalorder %s26, %s28
      %p35 = scmp.eq.s32.totalorder %s23, 1
      %p36 = por %p34, %p35
      %p37 = scmp.ne.s32.totalorder %s28, %s29
      %p38 = scmp.eq.s32.totalorder %s23, 0
      %p39 = por %p37, %p38
      %p40 = scmp.ne.s32.totalorder %s28, %s29
      %p41 = scmp.eq.s32.totalorder %s24, 1
      %p42 = por %p40, %p41
      %p44 = scmp.ne.s32.totalorder %s29, %s43
      %p45 = scmp.eq.s32.totalorder %s24, 0
      %p46 = por %p44, %p45
      %s48 = sadd.s32 %s47, 1
      %p51 = scmp.eq.s32.totalorder %s18, 1
      %p52 = scmp.ne.s32.totalorder %s47, %s49
      %p53 = scmp.eq.s32.totalorder %s18, 0
      %p54 = por %p52, %p53
      %p55 = scmp.ne.s32.totalorder %s47, %s49
      %p56 = scmp.eq.s32.totalorder %s23, 1
      %p57 = por %p55, %p56
      %p58 = scmp.ne.s32.totalorder %s49, %s50
      %p59 = scmp.eq.s32.totalorder %s23, 0
      %p60 = por %p58, %p59
      %p61 = scmp.ne.s32.totalorder %s49, %s50
      %p62 = scmp.eq.s32.totalorder %s24, 1
      %p63 = por %p61, %p62
      %p65 = scmp.ne.s32.totalorder %s50, %s64
      %p66 = scmp.eq.s32.totalorder %s24, 0
      %p67 = por %p65, %p66
      %s68 = ssub.s32 %s18, %s25
      %p69 = scmp.eq.s32.totalorder %s68, 0
      %s71 = sadd.s32 %s70, 1
      %s72 = scalar_select %p69, %s70, %s71
      %p75 = pneg %p69
      %p76 = scmp.eq.s32.totalorder %s18, 1
      %p77 = por %p75, %p76
      %p78 = scmp.ne.s32.totalorder %s70, %s73
      %p79 = scmp.eq.s32.totalorder %s18, 0
      %p80 = por %p78, %p79
      %p81 = scmp.ne.s32.totalorder %s70, %s73
      %p82 = scmp.eq.s32.totalorder %s23, 1
      %p83 = por %p81, %p82
      %p84 = scmp.ne.s32.totalorder %s73, %s74
      %p85 = scmp.eq.s32.totalorder %s23, 0
      %p86 = por %p84, %p85
      %p87 = scmp.ne.s32.totalorder %s73, %s74
      %p88 = scmp.eq.s32.totalorder %s24, 1
      %p89 = por %p87, %p88
      %p91 = scmp.ne.s32.totalorder %s74, %s90
      %p92 = scmp.eq.s32.totalorder %s24, 0
      %p93 = por %p91, %p92
      %p94 = scmp.le.s32.totalorder 1, %s18
      %p95 = scmp.lt.s32.totalorder %s18, 3
      %p96 = pnand %p94, %p95
      %p97 = pneg %p96
      // Predicated region
      $region9: #{tpu_custom_call.1} parent=5 // pred_check
        _
      $region10: #{tpu_custom_call.1} parent=5 // pred_check_branch
        %99 = sbr.rel (%p96) target = $region12
      $region11: #{tpu_custom_call.1} parent=5 // pred_region
        %s100 = ssub.s32 %s18, 1
        // Predicated region
        $region13: #{tpu_custom_call.1} parent=11 // pred_check
          %p101 = pneg %p39
        $region14: #{tpu_custom_call.1} parent=11 // pred_check_branch
          %103 = sbr.rel (%p101) target = $region16
        $region15: #{tpu_custom_call.1} parent=11 // pred_region
          %s105 = ssub.s32 2048, 2048
          %106 = vsyncadd [#allocation7], %s105
          %s107 = sshll.u32 [#allocation6], 4
          %s108 = int_to_ptr.vmem [resolvable:$true] %s107
          %113 = dma.hbm_to_vmem [thread:$0]  %s2, 2048, %s108, [#allocation7], 128, 128, 8
        $region16: #{tpu_custom_call.1} parent=11 // pred_fallthru
          _
        // Predicated region
        $region17: #{tpu_custom_call.1} parent=11 // pred_check
          %p114 = pneg %p60
        $region18: #{tpu_custom_call.1} parent=11 // pred_check_branch
          %116 = sbr.rel (%p114) target = $region20
        $region19: #{tpu_custom_call.1} parent=11 // pred_region
          _
        $region20: #{tpu_custom_call.1} parent=11 // pred_fallthru
          _
      $region12: #{tpu_custom_call.1} parent=5 // pred_fallthru
        _
      %p117 = scmp.lt.s32.totalorder %s18, 2
      // Predicated region
      $region21: #{tpu_custom_call.1} parent=5 // pred_check
        %p118 = pneg %p117
      $region22: #{tpu_custom_call.1} parent=5 // pred_check_branch
        %120 = sbr.rel (%p118) target = $region24
      $region23: #{tpu_custom_call.1} parent=5 // pred_region
        _
      $region24: #{tpu_custom_call.1} parent=5 // pred_fallthru
        _
      %p121 = scmp.le.s32.totalorder 1, %s18
      %p122 = scmp.lt.s32.totalorder %s18, 3
      %p123 = pnand %p121, %p122
      %p124 = pneg %p123
      // Predicated region
      $region25: #{tpu_custom_call.1} parent=5 // pred_check
        _
      $region26: #{tpu_custom_call.1} parent=5 // pred_check_branch
        %126 = sbr.rel (%p123) target = $region28
      $region27: #{tpu_custom_call.1} parent=5 // pred_region
        %s127 = ssub.s32 %s18, 1
        // Predicated region
        $region29: #{tpu_custom_call.1} parent=27 // pred_check
          %p128 = pneg %p39
        $region30: #{tpu_custom_call.1} parent=27 // pred_check_branch
          %130 = sbr.rel (%p128) target = $region32
        $region31: #{tpu_custom_call.1} parent=27 // pred_region
          %131 = dma.done [#allocation7], 2048
        $region32: #{tpu_custom_call.1} parent=27 // pred_fallthru
          _
        %p132 = pneg %p39
        %p133 = pneg %p36
        %p134 = pneg %p60
        %p135 = pneg %p57
        %p136 = pneg %p86
        %p137 = pneg %p83
        %s138 = sand.u32 %s73, 1
        %s139 = scalar_lea.sflag [#allocation8], %s138
        %s140 = sand.u32 %s73, 1
        %s141 = scalar_lea.vmem [#allocation9], %s140
        %s142 = smul.u32 %s23, 48
        loop: start=0, step=1, limit=8
        $region33: #{tpu_custom_call.1} parent=27 // loop_pre_header
          _
        $region34: #{tpu_custom_call.1} parent=27 // loop_header
          %s144 = sphi 0, %s148
          %p145 = scmp.ge.s32.totalorder %s144, 8
        $region35: #{tpu_custom_call.1} parent=27 // loop_header_branch
          %147 = sbr.rel (%p145) target = $region39
        $region36: #{tpu_custom_call.1} parent=27 // loop_body
          %s149 = sadd.s32 %s142, %s144
          %s150 = sld [smem:[#allocation5 + %s149]]
          %s151 = smul.addr %s150, 16
          %s152 = scalar_lea.hbm %s1, %s151
          %s153 = scalar_lea.vmem [#allocation2], %s144
          %s154 = scalar_lea.sflag [#allocation3], %s144
          // Predicated region
          $region40: #{tpu_custom_call.1} parent=36 // pred_check
            _
          $region41: #{tpu_custom_call.1} parent=36 // pred_check_branch
            %156 = sbr.rel target = $region43
          $region42: #{tpu_custom_call.1} parent=36 // pred_region
            %157 = sst [smem:[#allocation12]] [#allocation11]
            %158 = sst [smem:[#allocation13]] [#allocation10]
          $region43: #{tpu_custom_call.1} parent=36 // pred_fallthru
            _
          %160 = shalt.err (0)
          %s162 = sshll.u32 %s153, 4
          %s163 = int_to_ptr.vmem [resolvable:$true] %s162
          %165 = dma.hbm_to_vmem [thread:$0]  %s152, 16, %s163, %s154
        $region37: #{tpu_custom_call.1} parent=27 // loop_footer
          %s148 = sadd.s32 1, %s144
        $region38: #{tpu_custom_call.1} parent=27 // loop_footer_branch
          %143 = sbr.rel target = $region34
        $region39: #{tpu_custom_call.1} parent=27 // loop_exit
          _
        loop: start=0, step=1, limit=40
        $region44: #{tpu_custom_call.1} parent=27 // loop_pre_header
          _
        $region45: #{tpu_custom_call.1} parent=27 // loop_header
          %s167 = sphi 0, %s171
          %p168 = scmp.ge.s32.totalorder %s167, 40
        $region46: #{tpu_custom_call.1} parent=27 // loop_header_branch
          %170 = sbr.rel (%p168) target = $region50
        $region47: #{tpu_custom_call.1} parent=27 // loop_body
          %s172 = sadd.s32 %s167, 8
          %s173 = sand.u32 %s172, 7
          %s174 = sadd.s32 %s142, %s172
          %s175 = sld [smem:[#allocation5 + %s174]]
          %s176 = scalar_lea.sflag [#allocation3], %s173
          %s177 = smul.u32 1, 1
          %s178 = sshll.u32 %s177, 4
          %179 = dma.done %s176, %s178
          %s180 = smul.addr %s175, 16
          %s181 = scalar_lea.hbm %s1, %s180
          %s182 = scalar_lea.vmem [#allocation2], %s172
          // Predicated region
          $region51: #{tpu_custom_call.1} parent=47 // pred_check
            _
          $region52: #{tpu_custom_call.1} parent=47 // pred_check_branch
            %184 = sbr.rel target = $region54
          $region53: #{tpu_custom_call.1} parent=47 // pred_region
            %185 = sst [smem:[#allocation12]] [#allocation15]
            %186 = sst [smem:[#allocation13]] [#allocation14]
          $region54: #{tpu_custom_call.1} parent=47 // pred_fallthru
            _
          %188 = shalt.err (0)
          %s190 = sshll.u32 %s182, 4
          %s191 = int_to_ptr.vmem [resolvable:$true] %s190
          %193 = dma.hbm_to_vmem [thread:$0]  %s181, 16, %s191, %s176
        $region48: #{tpu_custom_call.1} parent=27 // loop_footer
          %s171 = sadd.s32 1, %s167
        $region49: #{tpu_custom_call.1} parent=27 // loop_footer_branch
          %166 = sbr.rel target = $region45
        $region50: #{tpu_custom_call.1} parent=27 // loop_exit
          _
        loop: start=0, step=1, limit=8
        $region55: #{tpu_custom_call.1} parent=27 // loop_pre_header
          _
        $region56: #{tpu_custom_call.1} parent=27 // loop_header
          %s195 = sphi 0, %s199
          %p196 = scmp.ge.s32.totalorder %s195, 8
        $region57: #{tpu_custom_call.1} parent=27 // loop_header_branch
          %198 = sbr.rel (%p196) target = $region61
        $region58: #{tpu_custom_call.1} parent=27 // loop_body
          %s200 = scalar_lea.sflag [#allocation3], %s195
          %s201 = smul.u32 1, 1
          %s202 = sshll.u32 %s201, 4
          %203 = dma.done %s200, %s202
        $region59: #{tpu_custom_call.1} parent=27 // loop_footer
          %s199 = sadd.s32 1, %s195
        $region60: #{tpu_custom_call.1} parent=27 // loop_footer_branch
          %194 = sbr.rel target = $region56
        $region61: #{tpu_custom_call.1} parent=27 // loop_exit
          _
        %v204 = vld [vmem:[#allocation2] sm:$0xff]
        %v205 = vld [vmem:[#allocation2 + $0x8] sm:$0xff]
        %v206 = vld [vmem:[#allocation2 + $0x10] sm:$0xff]
        %v207 = vld [vmem:[#allocation2 + $0x18] sm:$0xff]
        %v208 = vld [vmem:[#allocation2 + $0x20] sm:$0xff]
        %v209 = vld [vmem:[#allocation2 + $0x28] sm:$0xff]
        %v210 = vld [vmem:[#allocation6] sm:$0xff]
        %v211 = vld [vmem:[#allocation6 + $0x8] sm:$0xff]
        %v212 = vld [vmem:[#allocation6 + $0x10] sm:$0xff]
        %v213 = vld [vmem:[#allocation6 + $0x18] sm:$0xff]
        %v214 = vld [vmem:[#allocation6 + $0x20] sm:$0xff]
        %v215 = vld [vmem:[#allocation6 + $0x28] sm:$0xff]
        %v216 = vld [vmem:[#allocation6 + $0x30] sm:$0xff]
        %v217 = vld [vmem:[#allocation6 + $0x38] sm:$0xff]
        %v218 = vld [vmem:[#allocation6 + $0x40] sm:$0xff]
        %v219 = vld [vmem:[#allocation6 + $0x48] sm:$0xff]
        %v220 = vld [vmem:[#allocation6 + $0x50] sm:$0xff]
        %v221 = vld [vmem:[#allocation6 + $0x58] sm:$0xff]
        %v222 = vld [vmem:[#allocation6 + $0x60] sm:$0xff]
        %v223 = vld [vmem:[#allocation6 + $0x68] sm:$0xff]
        %v224 = vld [vmem:[#allocation6 + $0x70] sm:$0xff]
        %v225 = vld [vmem:[#allocation6 + $0x78] sm:$0xff]
        %v226 = vld [vmem:[%s3] sm:$0x1]
        %v228 = vlaneseq
        %v229 = vshrl.u32 %v228, 7
        %v230 = vsub.s32 0, %v229
        %v231 = vrot.slane %v226, %v230
        %233 = vmatprep.subr.mxu0 0.0
        %234 = vmatpush1.msra.mxu0 %v225
        %235 = vmatprep.subr.mxu0 0.0
        %236 = vmatpush1.msra.mxu0 %v224
        %237 = vmatprep.subr.mxu0 0.0
        %238 = vmatpush1.msra.mxu0 %v223
        %239 = vmatprep.subr.mxu0 0.0
        %240 = vmatpush1.msra.mxu0 %v222
        %241 = vmatprep.subr.mxu0 0.0
        %242 = vmatpush1.msra.mxu0 %v221
        %243 = vmatprep.subr.mxu0 0.0
        %244 = vmatpush1.msra.mxu0 %v220
        %245 = vmatprep.subr.mxu0 0.0
        %246 = vmatpush1.msra.mxu0 %v219
        %247 = vmatprep.subr.mxu0 0.0
        %248 = vmatpush1.msra.mxu0 %v218
        %249 = vmatprep.subr.mxu0 0.0
        %250 = vmatpush1.msra.mxu0 %v217
        %251 = vmatprep.subr.mxu0 0.0
        %252 = vmatpush1.msra.mxu0 %v216
        %253 = vmatprep.subr.mxu0 0.0
        %254 = vmatpush1.msra.mxu0 %v215
        %255 = vmatprep.subr.mxu0 0.0
        %256 = vmatpush1.msra.mxu0 %v214
        %257 = vmatprep.subr.mxu0 0.0
        %258 = vmatpush1.msra.mxu0 %v213
        %259 = vmatprep.subr.mxu0 0.0
        %260 = vmatpush1.msra.mxu0 %v212
        %261 = vmatprep.subr.mxu0 0.0
        %262 = vmatpush1.msra.mxu0 %v211
        %263 = vmatprep.subr.mxu0 0.0
        %264 = vmatpush1.msra.mxu0 %v210
        %265 = vmatprep.subr.mxu0 0.0
        %266 = vmatpush2.msra.mxu0 0.0
        %267 = vmatprep.subr.mxu0 0.0
        %268 = vmatpush2.msra.mxu0 0.0
        %269 = vmatprep.subr.mxu0 0.0
        %270 = vmatpush2.msra.mxu0 0.0
        %271 = vmatprep.subr.mxu0 0.0
        %272 = vmatpush2.msra.mxu0 0.0
        %273 = vmatprep.subr.mxu0 0.0
        %274 = vmatpush2.msra.mxu0 0.0
        %275 = vmatprep.subr.mxu0 0.0
        %276 = vmatpush2.msra.mxu0 0.0
        %277 = vmatprep.subr.mxu0 0.0
        %278 = vmatpush2.msra.mxu0 0.0
        %279 = vmatprep.subr.mxu0 0.0
        %280 = vmatpush2.msra.mxu0 0.0
        %281 = vmatprep.subr.mxu0 0.0
        %282 = vmatpush2.msra.mxu0 0.0
        %283 = vmatprep.subr.mxu0 0.0
        %284 = vmatpush2.msra.mxu0 0.0
        %285 = vmatprep.subr.mxu0 0.0
        %286 = vmatpush2.msra.mxu0 0.0
        %287 = vmatprep.subr.mxu0 0.0
        %288 = vmatpush2.msra.mxu0 0.0
        %289 = vmatprep.subr.mxu0 0.0
        %290 = vmatpush2.msra.mxu0 0.0
        %291 = vmatprep.subr.mxu0 0.0
        %292 = vmatpush2.msra.mxu0 0.0
        %293 = vmatprep.subr.mxu0 0.0
        %294 = vmatpush2.msra.mxu0 0.0
        %295 = vmatprep.subr.mxu0 0.0
        %296 = vmatpush2.msra.mxu0 0.0
        %297 = vmatprep.mubr.f32.mxu0 0.0
        %298 = vmatmul.mubr.f32.gmra.mxu0 %v204
        %v299 = vpop.f32.mrf.mxu0
        %v300 = vadd.f32 %v231, %v299
        %v301 = vpop.f32.mrf.mxu0
        %302 = vmatprep.mubr.f32.mxu0 0.0
        %303 = vmatmul.mubr.f32.gmra.mxu0 %v205
        %v304 = vpop.f32.mrf.mxu0
        %v305 = vadd.f32 %v231, %v304
        %v306 = vpop.f32.mrf.mxu0
        %307 = vmatprep.mubr.f32.mxu0 0.0
        %308 = vmatmul.mubr.f32.gmra.mxu0 %v206
        %v309 = vpop.f32.mrf.mxu0
        %v310 = vadd.f32 %v231, %v309
        %v311 = vpop.f32.mrf.mxu0
        %312 = vmatprep.mubr.f32.mxu0 0.0
        %313 = vmatmul.mubr.f32.gmra.mxu0 %v207
        %v314 = vpop.f32.mrf.mxu0
        %v315 = vadd.f32 %v231, %v314
        %v316 = vpop.f32.mrf.mxu0
        %317 = vmatprep.mubr.f32.mxu0 0.0
        %318 = vmatmul.mubr.f32.gmra.mxu0 %v208
        %v319 = vpop.f32.mrf.mxu0
        %v320 = vadd.f32 %v231, %v319
        %v321 = vpop.f32.mrf.mxu0
        %322 = vmatprep.mubr.f32.mxu0 0.0
        %323 = vmatmul.mubr.f32.gmra.mxu0 %v209
        %v324 = vpop.f32.mrf.mxu0
        %v325 = vadd.f32 %v231, %v324
        %v326 = vpop.f32.mrf.mxu0
        %327 = vdwg.mxu0
        %v328 = vrot.slane %v300, 4
        %v329 = vmax.f32 %v300, %v328
        %v330 = vrot.slane %v329, 2
        %v331 = vmax.f32 %v329, %v330
        %v332 = vrot.slane %v331, 1
        %v333 = vmax.f32 %v331, %v332
        %v334 = vrot.slane %v305, 4
        %v335 = vmax.f32 %v305, %v334
        %v336 = vrot.slane %v335, 2
        %v337 = vmax.f32 %v335, %v336
        %v338 = vrot.slane %v337, 1
        %v339 = vmax.f32 %v337, %v338
        %v340 = vrot.slane %v310, 4
        %v341 = vmax.f32 %v310, %v340
        %v342 = vrot.slane %v341, 2
        %v343 = vmax.f32 %v341, %v342
        %v344 = vrot.slane %v343, 1
        %v345 = vmax.f32 %v343, %v344
        %v346 = vrot.slane %v315, 4
        %v347 = vmax.f32 %v315, %v346
        %v348 = vrot.slane %v347, 2
        %v349 = vmax.f32 %v347, %v348
        %v350 = vrot.slane %v349, 1
        %v351 = vmax.f32 %v349, %v350
        %v352 = vrot.slane %v320, 4
        %v353 = vmax.f32 %v320, %v352
        %v354 = vrot.slane %v353, 2
        %v355 = vmax.f32 %v353, %v354
        %v356 = vrot.slane %v355, 1
        %v357 = vmax.f32 %v355, %v356
        %v358 = vrot.slane %v325, 4
        %v359 = vmax.f32 %v325, %v358
        %v360 = vrot.slane %v359, 2
        %v361 = vmax.f32 %v359, %v360
        %v362 = vrot.slane %v361, 1
        %v363 = vmax.f32 %v361, %v362
        %v364 = vmul.f32 %v333, %v333
        %v365 = vmul.f32 %v339, %v339
        %vm368 = vcmask 1041409
        %v369 = vsel %vm368, %v365, %v364
        %vm371 = vcmask 1041408
        %v372 = vsel %vm371, %v369, 0.0
        %373 = vadd.xlane.f32.xlu0 %v372
        %v374 = vpop.xlane.xlu0 %373
        %v375 = vmul.f32 %v345, %v345
        %v376 = vmul.f32 %v351, %v351
        %v379 = vsel %vm368, %v376, %v375
        %v381 = vsel %vm371, %v379, 0.0
        %382 = vadd.xlane.f32.xlu0 %v381
        %v383 = vpop.xlane.xlu0 %382
        %v384 = vmax.f32 %v374, 1e-24
        %v385 = vrsqrt.pop %v384
        %v386 = vmax.f32 %v383, 1e-24
        %v387 = vrsqrt.pop %v386
        %v388 = vmul.f32 %v385, %v387
        %v389 = vmul.f32 %v333, %v345
        %v390 = vmul.f32 %v339, %v351
        %v393 = vsel %vm368, %v390, %v389
        %v395 = vsel %vm371, %v393, 0.0
        %396 = vadd.xlane.f32.xlu0 %v395
        %v397 = vpop.xlane.xlu0 %396
        %v398 = vmul.f32 %v397, %v388
        %v399 = vsub.f32 1.0, %v398
        %v400 = vmul.f32 %v357, %v357
        %v401 = vmul.f32 %v363, %v363
        %v404 = vsel %vm368, %v401, %v400
        %v406 = vsel %vm371, %v404, 0.0
        %407 = vadd.xlane.f32.xlu0 %v406
        %v408 = vpop.xlane.xlu0 %407
        %v409 = vmax.f32 %v408, 1e-24
        %v410 = vrsqrt.pop %v409
        %v411 = vmul.f32 %v385, %v410
        %v412 = vmul.f32 %v333, %v357
        %v413 = vmul.f32 %v339, %v363
        %v416 = vsel %vm368, %v413, %v412
        %v418 = vsel %vm371, %v416, 0.0
        %419 = vadd.xlane.f32.xlu0 %v418
        %v420 = vpop.xlane.xlu0 %419
        %v421 = vmul.f32 %v420, %v411
        %v422 = vsub.f32 1.0, %v421
        %v423 = vsub.f32 %v399, %v422
        %v424 = vadd.f32 %v423, 0.2
        %v425 = vmax.f32 %v424, 0.0
        %vm426 = vcmask 1024
        %v427 = vsel %vm426, %v425, 0.0
        %428 = vadd.xlane.f32.xlu0 %v427
        %v429 = vpop.xlane.xlu0 %428
        %v430 = vrot.slane %v429, 4
        %v431 = vadd.f32 %v429, %v430
        %v432 = vrot.slane %v431, 2
        %v433 = vadd.f32 %v431, %v432
        %v434 = vrot.slane %v433, 1
        %v435 = vadd.f32 %v433, %v434
        %s436 = vtos %v435
        %v437 = vstv %s436
        %438 = vst [vmem:[%s141] sm:$0x1] %v437
        %s439 = sand.u32 %s73, 1
        %s440 = scalar_lea.sflag [#allocation8], %s439
        %s441 = sand.u32 %s73, 1
        %s442 = scalar_lea.vmem [#allocation9], %s441
        // Predicated region
        $region62: #{tpu_custom_call.1} parent=27 // pred_check
          %p443 = pneg %p83
        $region63: #{tpu_custom_call.1} parent=27 // pred_check_branch
          %445 = sbr.rel (%p443) target = $region65
        $region64: #{tpu_custom_call.1} parent=27 // pred_region
          %s447 = ssub.s32 16, 16
          %448 = vsyncadd %s440, %s447
          %s449 = smul.addr %s23, 16
          %s450 = scalar_lea.hbm %s4, %s449
          %s452 = sshll.u32 %s442, 4
          %s453 = int_to_ptr.vmem [resolvable:$true] %s452
          %455 = dma.vmem_to_hbm [thread:$0]  %s453, 16, %s450, %s440
        $region65: #{tpu_custom_call.1} parent=27 // pred_fallthru
          _
      $region28: #{tpu_custom_call.1} parent=5 // pred_fallthru
        _
      %p456 = scmp.le.s32.totalorder 2, %s18
      // Predicated region
      $region66: #{tpu_custom_call.1} parent=5 // pred_check
        %p457 = pneg %p456
      $region67: #{tpu_custom_call.1} parent=5 // pred_check_branch
        %459 = sbr.rel (%p457) target = $region69
      $region68: #{tpu_custom_call.1} parent=5 // pred_region
        %s460 = ssub.s32 %s18, 2
        // Predicated region
        $region70: #{tpu_custom_call.1} parent=68 // pred_check
          %p461 = pneg %p89
        $region71: #{tpu_custom_call.1} parent=68 // pred_check_branch
          %463 = sbr.rel (%p461) target = $region73
        $region72: #{tpu_custom_call.1} parent=68 // pred_region
          %s464 = sand.u32 %s74, 1
          %s465 = scalar_lea.sflag [#allocation8], %s464
          %s466 = sand.u32 %s74, 1
          %s467 = scalar_lea.vmem [#allocation9], %s466
          %468 = dma.done %s465, 16
        $region73: #{tpu_custom_call.1} parent=68 // pred_fallthru
          _
      $region69: #{tpu_custom_call.1} parent=5 // pred_fallthru
        _
    $region6: #{tpu_custom_call.1} parent=1 // loop_footer
      %s22 = sadd.s32 1, %s18
    $region7: #{tpu_custom_call.1} parent=1 // loop_footer_branch
      %17 = sbr.rel target = $region3
    $region8: #{tpu_custom_call.1} parent=1 // loop_exit
      _
    %469 = vsyncpa [#allocation7], 1
    %s470 = scalar_lea.sflag [#allocation7], 1
    %471 = vsyncpa %s470, 1
    %472 = vsyncpa [#allocation8], 1
    %s473 = scalar_lea.sflag [#allocation8], 1
    %474 = vsyncpa %s473, 1
  %475 = vsyncmov [#allocation3]
  %s476 = vpop.sfrf %475
  %p477 = scmp.eq.s32.totalorder %s476, 0
  %p478 = pneg %p477
  %480 = shalt.err (%p478)
  %s481 = scalar_lea.sflag [#allocation3], 1
  %482 = vsyncmov %s481
  %s483 = vpop.sfrf %482
  %p484 = scmp.eq.s32.totalorder %s483, 0
  %p485 = pneg %p484
  %487 = shalt.err (%p485)
  %s488 = scalar_lea.sflag [#allocation3], 2
  %489 = vsyncmov %s488
  %s490 = vpop.sfrf %489
  %p491 = scmp.eq.s32.totalorder %s490, 0
  %p492 = pneg %p491
  %494 = shalt.err (%p492)
  %s495 = scalar_lea.sflag [#allocation3], 3
  %496 = vsyncmov %s495
  %s497 = vpop.sfrf %496
  %p498 = scmp.eq.s32.totalorder %s497, 0
  %p499 = pneg %p498
  %501 = shalt.err (%p499)
  %s502 = scalar_lea.sflag [#allocation3], 4
  %503 = vsyncmov %s502
  %s504 = vpop.sfrf %503
  %p505 = scmp.eq.s32.totalorder %s504, 0
  %p506 = pneg %p505
  %508 = shalt.err (%p506)
  %s509 = scalar_lea.sflag [#allocation3], 5
  %510 = vsyncmov %s509
  %s511 = vpop.sfrf %510
  %p512 = scmp.eq.s32.totalorder %s511, 0
  %p513 = pneg %p512
  %515 = shalt.err (%p513)
  %s516 = scalar_lea.sflag [#allocation3], 6
  %517 = vsyncmov %s516
  %s518 = vpop.sfrf %517
  %p519 = scmp.eq.s32.totalorder %s518, 0
  %p520 = pneg %p519
  %522 = shalt.err (%p520)
  %s523 = scalar_lea.sflag [#allocation3], 7
  %524 = vsyncmov %s523
  %s525 = vpop.sfrf %524
  %p526 = scmp.eq.s32.totalorder %s525, 0
  %p527 = pneg %p526
  %529 = shalt.err (%p527)

</llo_original>
